<compile_context>
chip_gen: v5e
topology: v5e:2x2
jax: 0.10.0
libtpu: 0.0.40
codegen_flags: <defaults>
</compile_context>

<pallas_src>
import jax
import jax.numpy as jnp
from jax.experimental import pallas as pl
from jax.experimental.pallas import tpu as pltpu


def _ru(v, m):
    """Round v up to a multiple of m."""
    return (v + m - 1) // m * m


# ------------------------- fused forward (host prep + one pallas_call) -------------------------

def gcn_context_forward(params, sentence, context, A, inputs):
    f32, bf16 = jnp.float32, jnp.bfloat16

    N, F_in = inputs.shape
    H = params["w_gc1"].shape[1]
    nc = params["w_gc2"].shape[1]
    B = sentence.shape[0]
    d_fc1 = params["w_fc1"].shape[1]      # 512
    d_fc2 = params["w_fc2"].shape[1]      # 256
    d_out = params["w_fc3"].shape[1]      # 2
    assert d_fc1 == 2 * d_fc2             # relied on by the pad-free Wf2 side-by-side packing

    # ---------------- host-side algebraic folding (all f32) ----------------
    Af = A.astype(f32)
    Xf = inputs.astype(f32)

    # gather + sum(dim=1) as count matrices; zero column 0 => folds `x[0] = 0`
    # (valid because x is consumed exclusively through these gathers).
    Ssum = jax.nn.one_hot(sentence, N, dtype=f32).sum(axis=1)      # (B, N)
    Csum = jax.nn.one_hot(context, N, dtype=f32).sum(axis=1)       # (B, N)
    Ssum = Ssum.at[:, 0].set(0.0)
    Csum = Csum.at[:, 0].set(0.0)

    # Fold the second mean-aggregation through the gathers: Ssum0 @ (A @ h) = (Ssum0 @ A) @ h
    S_A = Ssum @ Af                                                # (B, N)
    C_A = Csum @ Af                                                # (B, N)
    nS = Ssum.sum(axis=1, keepdims=True)                           # (B, 1) bias multiplicities
    nC = Csum.sum(axis=1, keepdims=True)

    # Fold gc2's linear into fc1 (no nonlinearity between them):
    #   emd @ Wf1 = (S_A@h @ W2 + nS*b2) @ Wf1a + (C_A@h @ W2 + nC*b2) @ Wf1b
    w_f1a = params["w_fc1"][:nc]
    w_f1b = params["w_fc1"][nc:]
    Wa = params["w_gc2"] @ w_f1a                                   # (H, d_fc1)
    Wb = params["w_gc2"] @ w_f1b                                   # (H, d_fc1)
    bias_fc1 = (nS * (params["b_gc2"] @ w_f1a)
                + nC * (params["b_gc2"] @ w_f1b)
                + params["b_fc1"])                                 # (B, d_fc1)

    # ---------------- pack operands into 3 slabs (3 input DMAs total) ----------------
    pB = _ru(B, 8)

    # narrow bf16 slab (lane width = max small width); 16-row-aligned component offsets
    r_a = 0
    r_feat = r_a + _ru(N, 16)
    r_w1 = r_feat + _ru(N, 16)
    r_sca = r_w1 + _ru(F_in, 16)
    r_w3 = r_sca + _ru(2 * pB, 16)
    rows_s = r_w3 + _ru(d_fc2, 16)
    cols_s = max(N, F_in, H, d_out)

    small = jnp.zeros((rows_s, cols_s), f32)
    small = small.at[r_a:r_a + N, :N].set(Af)
    small = small.at[r_feat:r_feat + N, :F_in].set(Xf)
    small = small.at[r_w1:r_w1 + F_in, :H].set(params["w_gc1"])
    small = small.at[r_sca:r_sca + B, :N].set(S_A)
    small = small.at[r_sca + pB:r_sca + pB + B, :N].set(C_A)
    small = small.at[r_w3:r_w3 + d_fc2, :d_out].set(params["w_fc3"])
    small = small.astype(bf16)

    # wide bf16 slab: fc1 (folded) weights + fc2 weight stored as two K-halves side by side
    r_wa = 0
    r_wb = r_wa + _ru(H, 16)
    r_w2 = r_wb + _ru(H, 16)
    rows_w = r_w2 + _ru(d_fc2, 16)
    cols_w = d_fc1

    wide = jnp.zeros((rows_w, cols_w), f32)
    wide = wide.at[r_wa:r_wa + H, :].set(Wa)
    wide = wide.at[r_wb:r_wb + H, :].set(Wb)
    wide = wide.at[r_w2:r_w2 + d_fc2, 0:d_fc2].set(params["w_fc2"][:d_fc2, :])
    wide = wide.at[r_w2:r_w2 + d_fc2, d_fc2:2 * d_fc2].set(params["w_fc2"][d_fc2:, :])
    wide = wide.astype(bf16)

    # f32 bias slab (kept f32: elementwise math stays f32 on all generations)
    r_b1, r_b2, r_b3, r_bf1 = 0, 8, 16, 24
    rows_b = r_bf1 + _ru(B, 8)
    cols_b = max(H, d_fc1, d_fc2, d_out)

    biases = jnp.zeros((rows_b, cols_b), f32)
    biases = biases.at[r_b1:r_b1 + 1, :H].set(params["b_gc1"])
    biases = biases.at[r_b2:r_b2 + 1, :d_fc2].set(params["b_fc2"])
    biases = biases.at[r_b3:r_b3 + 1, :d_out].set(params["b_fc3"])
    biases = biases.at[r_bf1:r_bf1 + B, :].set(bias_fc1)

    # ---------------- the fused kernel ----------------
    def kernel(small_ref, wide_ref, bias_ref, out_ref):
        # gc1: mean-aggregate (A @ feat), linear, ReLU.  Dropout(p=.5, training=False) = id.
        a = small_ref[r_a:r_a + N, 0:N]                            # (N, N) bf16
        feat = small_ref[r_feat:r_feat + N, 0:F_in]                # (N, F) bf16
        w1 = small_ref[r_w1:r_w1 + F_in, 0:H]                      # (F, H) bf16
        b1 = bias_ref[r_b1:r_b1 + 1, 0:H]                          # (1, H) f32
        h = jnp.dot(a, feat, preferred_element_type=f32)           # (N, F) f32
        h = jnp.dot(h.astype(bf16), w1, preferred_element_type=f32) + b1
        h = jnp.maximum(h, 0.0).astype(bf16)                       # (N, H)

        # gathers (with the 2nd aggregation folded in on the host): one stacked dot.
        sca = small_ref[r_sca:r_sca + 2 * pB, 0:N]                 # rows 0:B = S_A, pB:pB+B = C_A
        hc = jnp.dot(sca, h, preferred_element_type=f32)           # (2pB, H) f32
        hc_s = hc[0:B].astype(bf16)                                # (B, H)
        hc_c = hc[pB:pB + B].astype(bf16)                          # (B, H)

        # fc1 with gc2's linear pre-composed into Wa/Wb and its bias folded into bias_fc1.
        wa = wide_ref[r_wa:r_wa + H, :]
        wb = wide_ref[r_wb:r_wb + H, :]
        bfc1 = bias_ref[r_bf1:r_bf1 + B, :]                        # (B, d_fc1) f32
        h1 = (jnp.dot(hc_s, wa, preferred_element_type=f32)
              + jnp.dot(hc_c, wb, preferred_element_type=f32) + bfc1)
        h1 = jnp.maximum(h1, 0.0).astype(bf16)                     # (B, d_fc1)

        # fc2: K split into two halves (weight stored side-by-side -> pad-free slab,
        # identical MXU tile count).
        w2l = wide_ref[r_w2:r_w2 + d_fc2, 0:d_fc2]
        w2r = wide_ref[r_w2:r_w2 + d_fc2, d_fc2:2 * d_fc2]
        b2 = bias_ref[r_b2:r_b2 + 1, 0:d_fc2]
        h2 = (jnp.dot(h1[:, 0:d_fc2], w2l, preferred_element_type=f32)
              + jnp.dot(h1[:, d_fc2:2 * d_fc2], w2r, preferred_element_type=f32) + b2)
        h2 = jnp.maximum(h2, 0.0).astype(bf16)                     # (B, d_fc2)

        # fc3
        w3 = small_ref[r_w3:r_w3 + d_fc2, 0:d_out]
        b3 = bias_ref[r_b3:r_b3 + 1, 0:d_out]
        out_ref[...] = jnp.dot(h2, w3, preferred_element_type=f32) + b3

    flops = 2.0 * (N * N * F_in            # A @ feat
                   + N * F_in * H          # gc1 linear
                   + (2 * pB) * N * H      # stacked gather (folded aggregation)
                   + 2 * B * H * d_fc1     # fc1 (gc2 folded in)
                   + B * d_fc1 * d_fc2     # fc2
                   + B * d_fc2 * d_out)    # fc3
    bytes_accessed = (rows_s * cols_s * 2 + rows_w * cols_w * 2
                      + rows_b * cols_b * 4 + B * d_out * 4)

    out = pl.pallas_call(
        kernel,
        out_shape=jax.ShapeDtypeStruct((B, d_out), jnp.float32),
        in_specs=[pl.BlockSpec(memory_space=pltpu.MemorySpace.VMEM)] * 3,
        out_specs=pl.BlockSpec(memory_space=pltpu.MemorySpace.VMEM),
        cost_estimate=pl.CostEstimate(flops=int(flops), transcendentals=0,
                                      bytes_accessed=int(bytes_accessed)),
    )(small, wide, biases)

    # .squeeze() in the reference is a no-op for B > 1 with no size-1 dims.
    return out


# ------------------------- pure-JAX f32 reference (for a sanity check) -------------------------

def reference_forward(params, sentence, context, A, inputs):
    h = jnp.maximum(A @ inputs @ params["w_gc1"] + params["b_gc1"], 0.0)
    x = A @ h @ params["w_gc2"] + params["b_gc2"]
    x = x.at[0].set(0.0)
    sent = x[sentence].sum(axis=1)
    cont = x[context].sum(axis=1)
    emd = jnp.concatenate([sent, cont], axis=1)
    h1 = jnp.maximum(emd @ params["w_fc1"] + params["b_fc1"], 0.0)
    h2 = jnp.maximum(h1 @ params["w_fc2"] + params["b_fc2"], 0.0)
    return h2 @ params["w_fc3"] + params["b_fc3"]


# ------------------------- setup / main -------------------------

def make_params(key, in_feats, hidden_size, num_class):
    ks = jax.random.split(key, 10)
    scale = 0.1

    def lin(kw, kb, fan_in, fan_out):
        w = scale * jax.random.normal(kw, (fan_in, fan_out), jnp.float32)
        b = scale * jax.random.normal(kb, (1, fan_out), jnp.float32)
        return w, b

    w_gc1, b_gc1 = lin(ks[0], ks[1], in_feats, hidden_size)
    w_gc2, b_gc2 = lin(ks[2], ks[3], hidden_size, num_class)
    w_fc1, b_fc1 = lin(ks[4], ks[5], num_class * 2, 512)
    w_fc2, b_fc2 = lin(ks[6], ks[7], 512, 256)
    w_fc3, b_fc3 = lin(ks[8], ks[9], 256, 2)
    return dict(w_gc1=w_gc1, b_gc1=b_gc1, w_gc2=w_gc2, b_gc2=b_gc2,
                w_fc1=w_fc1, b_fc1=b_fc1, w_fc2=w_fc2, b_fc2=b_fc2,
                w_fc3=w_fc3, b_fc3=b_fc3)


def build_adjacency(N):
    # Deterministic graph: edges i -> (i+1)%N and i -> (i+3)%N (in-degree 2 everywhere),
    # row-normalized so that `recv` mean-reduce == A @ h. Guard zero in-degree anyway.
    A = jnp.zeros((N, N), jnp.float32)
    src = jnp.arange(N)
    for shift in (1, 3):
        dst = (src + shift) % N
        A = A.at[dst, src].add(1.0)
    in_deg = jnp.maximum(A.sum(axis=1, keepdims=True), 1.0)
    return A / in_deg


if __name__ == "__main__":
    in_feats, hidden_size, num_class = 32, 32, 8
    N = 16            # number of graph nodes
    B, L_sent, L_cont = 2, 4, 4

    key = jax.random.PRNGKey(0)
    k_par, k_in, k_s, k_c = jax.random.split(key, 4)

    params = make_params(k_par, in_feats, hidden_size, num_class)
    A = build_adjacency(N)
    inputs = jax.random.normal(k_in, (N, in_feats), jnp.float32)
    sentence = jax.random.randint(k_s, (B, L_sent), 0, N)    # index tensor
    context = jax.random.randint(k_c, (B, L_cont), 0, N)     # index tensor

    fwd = jax.jit(gcn_context_forward)
    out = fwd(params, sentence, context, A, inputs)
    out = jax.block_until_ready(out)
    assert out.shape == (B, 2)

    # sanity-check against the f32 reference (loose tolerance: bf16 MXU operands)
    ref = reference_forward(params, sentence, context, A, inputs)
    assert bool(jnp.allclose(out, ref, rtol=1e-1, atol=1e-1)), "mismatch vs f32 reference"

    print("KERNEL_OK")
</pallas_src>

<mosaic_0001>
module attributes {stable_mosaic.version = 11 : i64} {
  func.func @kernel(%arg0: memref<336x32xbf16, #tpu.memory_space<vmem>>, %arg1: memref<320x512xbf16, #tpu.memory_space<vmem>>, %arg2: memref<32x512xf32, #tpu.memory_space<vmem>>, %arg3: memref<2x2xf32, #tpu.memory_space<vmem>>) attributes {dimension_semantics = [], scalar_prefetch = 0 : i64, scratch_operands = 0 : i64, tpu.core_type = #tpu.core_type<tc>} {
    %c0 = arith.constant 0 : index
    %c0_0 = arith.constant 0 : index
    %0 = vector.load %arg0[%c0, %c0_0] : memref<336x32xbf16, #tpu.memory_space<vmem>>, vector<16x16xbf16>
    %c16 = arith.constant 16 : index
    %c0_1 = arith.constant 0 : index
    %1 = vector.load %arg0[%c16, %c0_1] : memref<336x32xbf16, #tpu.memory_space<vmem>>, vector<16x32xbf16>
    %c32 = arith.constant 32 : index
    %c0_2 = arith.constant 0 : index
    %2 = vector.load %arg0[%c32, %c0_2] : memref<336x32xbf16, #tpu.memory_space<vmem>>, vector<32x32xbf16>
    %c0_3 = arith.constant 0 : index
    %c0_4 = arith.constant 0 : index
    %3 = vector.load %arg2[%c0_3, %c0_4] : memref<32x512xf32, #tpu.memory_space<vmem>>, vector<1x32xf32>
    %cst = arith.constant dense<0.000000e+00> : vector<16x32xf32>
    %4 = tpu.matmul %0, %1, %cst {dimension_numbers = #tpu.dot_dimension_numbers<[1], [0], [0], [1], [0, 0, 1, 1], [], []>} : vector<16x16xbf16>, vector<16x32xbf16>, vector<16x32xf32> -> vector<16x32xf32>
    %5 = arith.truncf %4 : vector<16x32xf32> to vector<16x32xbf16>
    %cst_5 = arith.constant dense<0.000000e+00> : vector<16x32xf32>
    %6 = tpu.matmul %5, %2, %cst_5 {dimension_numbers = #tpu.dot_dimension_numbers<[1], [0], [0], [1], [0, 0, 1, 1], [], []>} : vector<16x32xbf16>, vector<32x32xbf16>, vector<16x32xf32> -> vector<16x32xf32>
    %7 = vector.broadcast %3 : vector<1x32xf32> to vector<16x32xf32>
    %8 = arith.addf %6, %7 : vector<16x32xf32>
    %cst_6 = arith.constant 0.000000e+00 : f32
    %9 = vector.broadcast %cst_6 : f32 to vector<16x32xf32>
    %10 = arith.maximumf %8, %9 : vector<16x32xf32>
    %11 = arith.truncf %10 : vector<16x32xf32> to vector<16x32xbf16>
    %c64 = arith.constant 64 : index
    %c0_7 = arith.constant 0 : index
    %12 = vector.load %arg0[%c64, %c0_7] : memref<336x32xbf16, #tpu.memory_space<vmem>>, vector<16x16xbf16>
    %cst_8 = arith.constant dense<0.000000e+00> : vector<16x32xf32>
    %13 = tpu.matmul %12, %11, %cst_8 {dimension_numbers = #tpu.dot_dimension_numbers<[1], [0], [0], [1], [0, 0, 1, 1], [], []>} : vector<16x16xbf16>, vector<16x32xbf16>, vector<16x32xf32> -> vector<16x32xf32>
    %14 = vector.extract_strided_slice %13 {offsets = [0, 0], sizes = [2, 32], strides = [1, 1]} : vector<16x32xf32> to vector<2x32xf32>
    %15 = arith.truncf %14 : vector<2x32xf32> to vector<2x32xbf16>
    %16 = vector.extract_strided_slice %13 {offsets = [8, 0], sizes = [2, 32], strides = [1, 1]} : vector<16x32xf32> to vector<2x32xf32>
    %17 = arith.truncf %16 : vector<2x32xf32> to vector<2x32xbf16>
    %c0_9 = arith.constant 0 : index
    %c0_10 = arith.constant 0 : index
    %18 = vector.load %arg1[%c0_9, %c0_10] : memref<320x512xbf16, #tpu.memory_space<vmem>>, vector<32x512xbf16>
    %c32_11 = arith.constant 32 : index
    %c0_12 = arith.constant 0 : index
    %19 = vector.load %arg1[%c32_11, %c0_12] : memref<320x512xbf16, #tpu.memory_space<vmem>>, vector<32x512xbf16>
    %c24 = arith.constant 24 : index
    %c0_13 = arith.constant 0 : index
    %20 = vector.load %arg2[%c24, %c0_13] : memref<32x512xf32, #tpu.memory_space<vmem>>, vector<2x512xf32>
    %cst_14 = arith.constant dense<0.000000e+00> : vector<2x512xf32>
    %21 = tpu.matmul %15, %18, %cst_14 {dimension_numbers = #tpu.dot_dimension_numbers<[1], [0], [0], [1], [0, 0, 1, 1], [], []>} : vector<2x32xbf16>, vector<32x512xbf16>, vector<2x512xf32> -> vector<2x512xf32>
    %cst_15 = arith.constant dense<0.000000e+00> : vector<2x512xf32>
    %22 = tpu.matmul %17, %19, %cst_15 {dimension_numbers = #tpu.dot_dimension_numbers<[1], [0], [0], [1], [0, 0, 1, 1], [], []>} : vector<2x32xbf16>, vector<32x512xbf16>, vector<2x512xf32> -> vector<2x512xf32>
    %23 = arith.addf %21, %22 : vector<2x512xf32>
    %24 = arith.addf %23, %20 : vector<2x512xf32>
    %cst_16 = arith.constant 0.000000e+00 : f32
    %25 = vector.broadcast %cst_16 : f32 to vector<2x512xf32>
    %26 = arith.maximumf %24, %25 : vector<2x512xf32>
    %27 = arith.truncf %26 : vector<2x512xf32> to vector<2x512xbf16>
    %c64_17 = arith.constant 64 : index
    %c0_18 = arith.constant 0 : index
    %28 = vector.load %arg1[%c64_17, %c0_18] : memref<320x512xbf16, #tpu.memory_space<vmem>>, vector<256x256xbf16>
    %c64_19 = arith.constant 64 : index
    %c256 = arith.constant 256 : index
    %29 = vector.load %arg1[%c64_19, %c256] : memref<320x512xbf16, #tpu.memory_space<vmem>>, vector<256x256xbf16>
    %c8 = arith.constant 8 : index
    %c0_20 = arith.constant 0 : index
    %30 = vector.load %arg2[%c8, %c0_20] : memref<32x512xf32, #tpu.memory_space<vmem>>, vector<1x256xf32>
    %31 = vector.extract_strided_slice %27 {offsets = [0, 0], sizes = [2, 256], strides = [1, 1]} : vector<2x512xbf16> to vector<2x256xbf16>
    %cst_21 = arith.constant dense<0.000000e+00> : vector<2x256xf32>
    %32 = tpu.matmul %31, %28, %cst_21 {dimension_numbers = #tpu.dot_dimension_numbers<[1], [0], [0], [1], [0, 0, 1, 1], [], []>} : vector<2x256xbf16>, vector<256x256xbf16>, vector<2x256xf32> -> vector<2x256xf32>
    %33 = vector.extract_strided_slice %27 {offsets = [0, 256], sizes = [2, 256], strides = [1, 1]} : vector<2x512xbf16> to vector<2x256xbf16>
    %cst_22 = arith.constant dense<0.000000e+00> : vector<2x256xf32>
    %34 = tpu.matmul %33, %29, %cst_22 {dimension_numbers = #tpu.dot_dimension_numbers<[1], [0], [0], [1], [0, 0, 1, 1], [], []>} : vector<2x256xbf16>, vector<256x256xbf16>, vector<2x256xf32> -> vector<2x256xf32>
    %35 = arith.addf %32, %34 : vector<2x256xf32>
    %36 = vector.broadcast %30 : vector<1x256xf32> to vector<2x256xf32>
    %37 = arith.addf %35, %36 : vector<2x256xf32>
    %cst_23 = arith.constant 0.000000e+00 : f32
    %38 = vector.broadcast %cst_23 : f32 to vector<2x256xf32>
    %39 = arith.maximumf %37, %38 : vector<2x256xf32>
    %40 = arith.truncf %39 : vector<2x256xf32> to vector<2x256xbf16>
    %c80 = arith.constant 80 : index
    %c0_24 = arith.constant 0 : index
    %41 = vector.load %arg0[%c80, %c0_24] : memref<336x32xbf16, #tpu.memory_space<vmem>>, vector<256x2xbf16>
    %c16_25 = arith.constant 16 : index
    %c0_26 = arith.constant 0 : index
    %42 = vector.load %arg2[%c16_25, %c0_26] : memref<32x512xf32, #tpu.memory_space<vmem>>, vector<1x2xf32>
    %cst_27 = arith.constant dense<0.000000e+00> : vector<2x2xf32>
    %43 = tpu.matmul %40, %41, %cst_27 {dimension_numbers = #tpu.dot_dimension_numbers<[1], [0], [0], [1], [0, 0, 1, 1], [], []>} : vector<2x256xbf16>, vector<256x2xbf16>, vector<2x2xf32> -> vector<2x2xf32>
    %44 = vector.broadcast %42 : vector<1x2xf32> to vector<2x2xf32>
    %45 = arith.addf %43, %44 : vector<2x2xf32>
    %c0_28 = arith.constant 0 : index
    %c0_29 = arith.constant 0 : index
    %46 = vector.load %arg3[%c0_28, %c0_29] : memref<2x2xf32, #tpu.memory_space<vmem>>, vector<2x2xf32>
    tpu.vector_store %arg3[%c0_28, %c0_29], %45 {strides = array<i32>} : memref<2x2xf32, #tpu.memory_space<vmem>>, vector<2x2xf32>,
    return
  }
}

</mosaic_0001>

<llo_original>
// kernel: gcn_context_forward.1
$region0: #{gcn_context_forward.1}
  #allocation0 [shape = 'u32[]', space=smem, size = 0x4, offset = 0x4, fixed_abs, tag = 'smem constant byte address 0x4 - core index']
  #allocation1 [shape = 'u32[72,128]{1,0:T(1,128)}', space=vmem, size = 0x9000, scoped, tag = 'internal scratch']
  %s0 = inlined_call_operand.vmem [shape: bf16[336,32], index: 0, kind: input, shape index: {}]
  %s1 = inlined_call_operand.vmem [shape: bf16[320,512], index: 1, kind: input, shape index: {}]
  %s2 = inlined_call_operand.vmem [shape: f32[32,512], index: 2, kind: input, shape index: {}]
  %s3 = inlined_call_operand.hbm [shape: f32[2,2], index: 3, kind: output, shape index: {}]
  %s4 = sld [smem:[#allocation0]]
  $region22: #{gcn_context_forward.1} parent=0
    _
  %s6 = ssub.s32 1, %s4
  %s7 = scalar_select 0, %s6, %s4
  $region1: #{gcn_context_forward.1} parent=0
    #allocation2 [shape = 'u8[1024]{0}', space=vmem, size = 0x400, scoped, tag = 'output window, operand 0, single buffered']
    #allocation3 [shape = 's32[1]{0}', space=sflag, size = 0x4, scoped, tag = 'scoped memory for gcn_context_forward.1']
    %8 = vsyncpa [#allocation3], 0
    // Predicated region
    $region2: #{gcn_context_forward.1} parent=1 // pred_check
      _
    $region3: #{gcn_context_forward.1} parent=1 // pred_check_branch
      %10 = sbr.rel (0) target = $region5
    $region4: #{gcn_context_forward.1} parent=1 // pred_region
      _
    $region5: #{gcn_context_forward.1} parent=1 // pred_fallthru
      _
    // Predicated region
    $region6: #{gcn_context_forward.1} parent=1 // pred_check
      _
    $region7: #{gcn_context_forward.1} parent=1 // pred_check_branch
      %12 = sbr.rel (0) target = $region9
    $region8: #{gcn_context_forward.1} parent=1 // pred_region
      _
    $region9: #{gcn_context_forward.1} parent=1 // pred_fallthru
      _
    // Predicated region
    $region10: #{gcn_context_forward.1} parent=1 // pred_check
      _
    $region11: #{gcn_context_forward.1} parent=1 // pred_check_branch
      %14 = sbr.rel (0) target = $region13
    $region12: #{gcn_context_forward.1} parent=1 // pred_region
      _
    $region13: #{gcn_context_forward.1} parent=1 // pred_fallthru
      _
    %v16 = vld [vmem:[%s0] sm:$0xf]
    %v17 = vld [vmem:[%s0 + $0x4] sm:$0xf]
    %v18 = vld [vmem:[%s0 + $0x8] sm:$0xf]
    %v19 = vld [vmem:[%s0 + $0xc] sm:$0xf]
    %v20 = vld [vmem:[%s0 + $0x10] sm:$0xf]
    %v21 = vld [vmem:[%s0 + $0x14] sm:$0xf]
    %v22 = vld [vmem:[%s0 + $0x18] sm:$0xf]
    %v23 = vld [vmem:[%s0 + $0x1c] sm:$0xf]
    %v24 = vld [vmem:[%s2] ss:$0 sm:$0xff]
    %v27 = vunpack.c.l.b16 %v16
    %v28 = vunpack.c.l.b16 %v17
    %v29 = vpack.c.b16 %v28, %v27
    %v32 = vunpack.c.l.b16 %v18
    %v33 = vunpack.c.l.b16 %v19
    %v34 = vpack.c.b16 %v33, %v32
    %vm36 = vcmask 130048
    %v38 = vsel %vm36, %v29, 0
    %40 = vmatpush.bf16.msra.mxu0 0
    %41 = vmatpush.bf16.msra.mxu0 0
    %42 = vmatpush.bf16.msra.mxu0 0
    %43 = vmatpush.bf16.msra.mxu0 0
    %44 = vmatpush.bf16.msra.mxu0 0
    %45 = vmatpush.bf16.msra.mxu0 0
    %46 = vmatpush.bf16.msra.mxu0 0
    %47 = vmatpush.bf16.msra.mxu0 %v34
    %48 = vmatmul.bf16.gmra.mxu0 %v38
    %v49 = vpop.f32.mrf.mxu0
    %v50 = vadd.f32 0.0, %v49
    %v51 = vpop.f32.mrf.mxu0
    %v52 = vadd.f32 0.0, %v51
    %53 = vdwg.mxu0
    %v54 = vpack.c.bf16 %v52, %v50
    %v59 = vunpack.c.l.b16 %v20
    %v60 = vunpack.c.l.b16 %v21
    %v61 = vunpack.c.l.b16 %v22
    %v62 = vunpack.c.l.b16 %v23
    %v63 = vpack.c.b16 %v60, %v59
    %v64 = vpack.c.b16 %v62, %v61
    %vm67 = vcmask 261120
    %v69 = vsel %vm67, %v54, 0
    %71 = vmatpush.bf16.msra.mxu0 0
    %72 = vmatpush.bf16.msra.mxu0 0
    %73 = vmatpush.bf16.msra.mxu0 0
    %74 = vmatpush.bf16.msra.mxu0 0
    %75 = vmatpush.bf16.msra.mxu0 0
    %76 = vmatpush.bf16.msra.mxu0 0
    %77 = vmatpush.bf16.msra.mxu0 %v64
    %78 = vmatpush.bf16.msra.mxu0 %v63
    %79 = vmatmul.bf16.gmra.mxu0 %v69
    %v80 = vpop.f32.mrf.mxu0
    %v81 = vadd.f32 %v24, %v80
    %v82 = vpop.f32.mrf.mxu0
    %v83 = vadd.f32 %v24, %v82
    %84 = vdwg.mxu0
    %v85 = vmax.f32 %v81, 0.0
    %v86 = vmax.f32 %v83, 0.0
    %v87 = vpack.c.bf16 %v86, %v85
    %v88 = vld [vmem:[%s0 + $0x20] sm:$0xf]
    %v89 = vld [vmem:[%s0 + $0x24] sm:$0xf]
    %v92 = vunpack.c.l.b16 %v88
    %v93 = vunpack.c.l.b16 %v89
    %v94 = vpack.c.b16 %v93, %v92
    %v96 = vsel %vm36, %v94, 0
    %98 = vmatpush.bf16.msra.mxu0 0
    %99 = vmatpush.bf16.msra.mxu0 0
    %100 = vmatpush.bf16.msra.mxu0 0
    %101 = vmatpush.bf16.msra.mxu0 0
    %102 = vmatpush.bf16.msra.mxu0 0
    %103 = vmatpush.bf16.msra.mxu0 0
    %104 = vmatpush.bf16.msra.mxu0 0
    %105 = vmatpush.bf16.msra.mxu0 %v87
    %106 = vmatmul.bf16.gmra.mxu0 %v96
    %v107 = vpop.f32.mrf.mxu0
    %v108 = vadd.f32 0.0, %v107
    %v109 = vpop.f32.mrf.mxu0
    %v110 = vadd.f32 0.0, %v109
    %111 = vdwg.mxu0
    %v112 = vpack.c.bf16 %v108, %v108
    %v113 = vpack.c.bf16 %v110, %v110
    %v114 = vld [vmem:[%s1] sm:$0xff]
    %v115 = vld [vmem:[%s1 + $0x8] sm:$0xff]
    %v116 = vld [vmem:[%s1 + $0x10] sm:$0xff]
    %v117 = vld [vmem:[%s1 + $0x18] sm:$0xff]
    %v118 = vld [vmem:[%s1 + $0x20] sm:$0xff]
    %v119 = vld [vmem:[%s1 + $0x28] sm:$0xff]
    %v120 = vld [vmem:[%s1 + $0x30] sm:$0xff]
    %v121 = vld [vmem:[%s1 + $0x38] sm:$0xff]
    %v122 = vld [vmem:[%s1 + $0x40] sm:$0xff]
    %v123 = vld [vmem:[%s1 + $0x48] sm:$0xff]
    %v124 = vld [vmem:[%s1 + $0x50] sm:$0xff]
    %v125 = vld [vmem:[%s1 + $0x58] sm:$0xff]
    %v126 = vld [vmem:[%s1 + $0x60] sm:$0xff]
    %v127 = vld [vmem:[%s1 + $0x68] sm:$0xff]
    %v128 = vld [vmem:[%s1 + $0x70] sm:$0xff]
    %v129 = vld [vmem:[%s1 + $0x78] sm:$0xff]
    %v130 = vld [vmem:[%s2 + $0x60] sm:$0x3]
    %v131 = vld [vmem:[%s2 + $0x68] sm:$0x3]
    %v132 = vld [vmem:[%s2 + $0x70] sm:$0x3]
    %v133 = vld [vmem:[%s2 + $0x78] sm:$0x3]
    %v142 = vunpack.c.l.b16 %v122
    %v143 = vunpack.c.h.b16 %v122
    %v144 = vunpack.c.l.b16 %v123
    %v145 = vunpack.c.h.b16 %v123
    %v146 = vunpack.c.l.b16 %v124
    %v147 = vunpack.c.h.b16 %v124
    %v148 = vunpack.c.l.b16 %v125
    %v149 = vunpack.c.h.b16 %v125
    %v150 = vunpack.c.l.b16 %v126
    %v151 = vunpack.c.h.b16 %v126
    %v152 = vunpack.c.l.b16 %v127
    %v153 = vunpack.c.h.b16 %v127
    %v154 = vunpack.c.l.b16 %v128
    %v155 = vunpack.c.h.b16 %v128
    %v156 = vunpack.c.l.b16 %v129
    %v157 = vunpack.c.h.b16 %v129
    %v158 = vpack.c.b16 %v146, %v142
    %v159 = vpack.c.b16 %v147, %v143
    %v160 = vpack.c.b16 %v148, %v144
    %v161 = vpack.c.b16 %v149, %v145
    %v162 = vpack.c.b16 %v154, %v150
    %v163 = vpack.c.b16 %v155, %v151
    %v164 = vpack.c.b16 %v156, %v152
    %v165 = vpack.c.b16 %v157, %v153
    %v175 = vsel %vm67, %v113, 0
    %177 = vmatpush.bf16.msra.mxu0 0
    %178 = vmatpush.bf16.msra.mxu0 0
    %179 = vmatpush.bf16.msra.mxu0 0
    %180 = vmatpush.bf16.msra.mxu0 0
    %181 = vmatpush.bf16.msra.mxu0 0
    %182 = vmatpush.bf16.msra.mxu0 0
    %183 = vmatpush.bf16.msra.mxu0 %v162
    %184 = vmatpush.bf16.msra.mxu0 %v158
    %185 = vmatmul.bf16.gmra.mxu0 %v175
    %v186 = vpop.f32.mrf.mxu0
    %v187 = vadd.f32 0.0, %v186
    %v188 = vpop.f32.mrf.mxu0
    %189 = vdwg.mxu0
    %190 = vmatpush.bf16.msra.mxu0 0
    %191 = vmatpush.bf16.msra.mxu0 0
    %192 = vmatpush.bf16.msra.mxu0 0
    %193 = vmatpush.bf16.msra.mxu0 0
    %194 = vmatpush.bf16.msra.mxu0 0
    %195 = vmatpush.bf16.msra.mxu0 0
    %196 = vmatpush.bf16.msra.mxu0 %v163
    %197 = vmatpush.bf16.msra.mxu0 %v159
    %198 = vmatmul.bf16.gmra.mxu0 %v175
    %v199 = vpop.f32.mrf.mxu0
    %v200 = vadd.f32 0.0, %v199
    %v201 = vpop.f32.mrf.mxu0
    %202 = vdwg.mxu0
    %203 = vmatpush.bf16.msra.mxu0 0
    %204 = vmatpush.bf16.msra.mxu0 0
    %205 = vmatpush.bf16.msra.mxu0 0
    %206 = vmatpush.bf16.msra.mxu0 0
    %207 = vmatpush.bf16.msra.mxu0 0
    %208 = vmatpush.bf16.msra.mxu0 0
    %209 = vmatpush.bf16.msra.mxu0 %v164
    %210 = vmatpush.bf16.msra.mxu0 %v160
    %211 = vmatmul.bf16.gmra.mxu0 %v175
    %v212 = vpop.f32.mrf.mxu0
    %v213 = vadd.f32 0.0, %v212
    %v214 = vpop.f32.mrf.mxu0
    %215 = vdwg.mxu0
    %216 = vmatpush.bf16.msra.mxu0 0
    %217 = vmatpush.bf16.msra.mxu0 0
    %218 = vmatpush.bf16.msra.mxu0 0
    %219 = vmatpush.bf16.msra.mxu0 0
    %220 = vmatpush.bf16.msra.mxu0 0
    %221 = vmatpush.bf16.msra.mxu0 0
    %222 = vmatpush.bf16.msra.mxu0 %v165
    %223 = vmatpush.bf16.msra.mxu0 %v161
    %224 = vmatmul.bf16.gmra.mxu0 %v175
    %v225 = vpop.f32.mrf.mxu0
    %v226 = vadd.f32 0.0, %v225
    %v227 = vpop.f32.mrf.mxu0
    %228 = vdwg.mxu0
    %v237 = vunpack.c.l.b16 %v114
    %v238 = vunpack.c.h.b16 %v114
    %v239 = vunpack.c.l.b16 %v115
    %v240 = vunpack.c.h.b16 %v115
    %v241 = vunpack.c.l.b16 %v116
    %v242 = vunpack.c.h.b16 %v116
    %v243 = vunpack.c.l.b16 %v117
    %v244 = vunpack.c.h.b16 %v117
    %v245 = vunpack.c.l.b16 %v118
    %v246 = vunpack.c.h.b16 %v118
    %v247 = vunpack.c.l.b16 %v119
    %v248 = vunpack.c.h.b16 %v119
    %v249 = vunpack.c.l.b16 %v120
    %v250 = vunpack.c.h.b16 %v120
    %v251 = vunpack.c.l.b16 %v121
    %v252 = vunpack.c.h.b16 %v121
    %v253 = vpack.c.b16 %v241, %v237
    %v254 = vpack.c.b16 %v242, %v238
    %v255 = vpack.c.b16 %v243, %v239
    %v256 = vpack.c.b16 %v244, %v240
    %v257 = vpack.c.b16 %v249, %v245
    %v258 = vpack.c.b16 %v250, %v246
    %v259 = vpack.c.b16 %v251, %v247
    %v260 = vpack.c.b16 %v252, %v248
    %v270 = vsel %vm67, %v112, 0
    %272 = vmatpush.bf16.msra.mxu0 0
    %273 = vmatpush.bf16.msra.mxu0 0
    %274 = vmatpush.bf16.msra.mxu0 0
    %275 = vmatpush.bf16.msra.mxu0 0
    %276 = vmatpush.bf16.msra.mxu0 0
    %277 = vmatpush.bf16.msra.mxu0 0
    %278 = vmatpush.bf16.msra.mxu0 %v257
    %279 = vmatpush.bf16.msra.mxu0 %v253
    %280 = vmatmul.bf16.gmra.mxu0 %v270
    %v281 = vpop.f32.mrf.mxu0
    %v282 = vadd.f32 %v187, %v281
    %v283 = vpop.f32.mrf.mxu0
    %284 = vdwg.mxu0
    %285 = vmatpush.bf16.msra.mxu0 0
    %286 = vmatpush.bf16.msra.mxu0 0
    %287 = vmatpush.bf16.msra.mxu0 0
    %288 = vmatpush.bf16.msra.mxu0 0
    %289 = vmatpush.bf16.msra.mxu0 0
    %290 = vmatpush.bf16.msra.mxu0 0
    %291 = vmatpush.bf16.msra.mxu0 %v258
    %292 = vmatpush.bf16.msra.mxu0 %v254
    %293 = vmatmul.bf16.gmra.mxu0 %v270
    %v294 = vpop.f32.mrf.mxu0
    %v295 = vadd.f32 %v200, %v294
    %v296 = vpop.f32.mrf.mxu0
    %297 = vdwg.mxu0
    %298 = vmatpush.bf16.msra.mxu0 0
    %299 = vmatpush.bf16.msra.mxu0 0
    %300 = vmatpush.bf16.msra.mxu0 0
    %301 = vmatpush.bf16.msra.mxu0 0
    %302 = vmatpush.bf16.msra.mxu0 0
    %303 = vmatpush.bf16.msra.mxu0 0
    %304 = vmatpush.bf16.msra.mxu0 %v259
    %305 = vmatpush.bf16.msra.mxu0 %v255
    %306 = vmatmul.bf16.gmra.mxu0 %v270
    %v307 = vpop.f32.mrf.mxu0
    %v308 = vadd.f32 %v213, %v307
    %v309 = vpop.f32.mrf.mxu0
    %310 = vdwg.mxu0
    %311 = vmatpush.bf16.msra.mxu0 0
    %312 = vmatpush.bf16.msra.mxu0 0
    %313 = vmatpush.bf16.msra.mxu0 0
    %314 = vmatpush.bf16.msra.mxu0 0
    %315 = vmatpush.bf16.msra.mxu0 0
    %316 = vmatpush.bf16.msra.mxu0 0
    %317 = vmatpush.bf16.msra.mxu0 %v260
    %318 = vmatpush.bf16.msra.mxu0 %v256
    %319 = vmatmul.bf16.gmra.mxu0 %v270
    %v320 = vpop.f32.mrf.mxu0
    %v321 = vadd.f32 %v226, %v320
    %v322 = vpop.f32.mrf.mxu0
    %323 = vdwg.mxu0
    %v324 = vadd.f32 %v282, %v130
    %v325 = vadd.f32 %v295, %v131
    %v326 = vadd.f32 %v308, %v132
    %v327 = vadd.f32 %v321, %v133
    %v328 = vmax.f32 %v324, 0.0
    %v329 = vmax.f32 %v325, 0.0
    %v330 = vmax.f32 %v326, 0.0
    %v331 = vmax.f32 %v327, 0.0
    %v332 = vpack.c.bf16 %v329, %v328
    %v333 = vpack.c.bf16 %v331, %v330
    %v334 = vld [vmem:[%s1 + $0x80] sm:$0xff]
    %v335 = vld [vmem:[%s1 + $0x90] sm:$0xff]
    %v336 = vld [vmem:[%s1 + $0xa0] sm:$0xff]
    %v337 = vld [vmem:[%s1 + $0xb0] sm:$0xff]
    %v338 = vld [vmem:[%s1 + $0xc0] sm:$0xff]
    %v339 = vld [vmem:[%s1 + $0xd0] sm:$0xff]
    %v340 = vld [vmem:[%s1 + $0xe0] sm:$0xff]
    %v341 = vld [vmem:[%s1 + $0xf0] sm:$0xff]
    %v342 = vld [vmem:[%s1 + $0x100] sm:$0xff]
    %v343 = vld [vmem:[%s1 + $0x110] sm:$0xff]
    %v344 = vld [vmem:[%s1 + $0x120] sm:$0xff]
    %v345 = vld [vmem:[%s1 + $0x130] sm:$0xff]
    %v346 = vld [vmem:[%s1 + $0x140] sm:$0xff]
    %v347 = vld [vmem:[%s1 + $0x150] sm:$0xff]
    %v348 = vld [vmem:[%s1 + $0x160] sm:$0xff]
    %v349 = vld [vmem:[%s1 + $0x170] sm:$0xff]
    %v350 = vld [vmem:[%s1 + $0x180] sm:$0xff]
    %v351 = vld [vmem:[%s1 + $0x190] sm:$0xff]
    %v352 = vld [vmem:[%s1 + $0x1a0] sm:$0xff]
    %v353 = vld [vmem:[%s1 + $0x1b0] sm:$0xff]
    %v354 = vld [vmem:[%s1 + $0x1c0] sm:$0xff]
    %v355 = vld [vmem:[%s1 + $0x1d0] sm:$0xff]
    %v356 = vld [vmem:[%s1 + $0x1e0] sm:$0xff]
    %v357 = vld [vmem:[%s1 + $0x1f0] sm:$0xff]
    %v358 = vld [vmem:[%s1 + $0x200] sm:$0xff]
    %v359 = vld [vmem:[%s1 + $0x210] sm:$0xff]
    %v360 = vld [vmem:[%s1 + $0x220] sm:$0xff]
    %v361 = vld [vmem:[%s1 + $0x230] sm:$0xff]
    %v362 = vld [vmem:[%s1 + $0x240] sm:$0xff]
    %v363 = vld [vmem:[%s1 + $0x250] sm:$0xff]
    %v364 = vld [vmem:[%s1 + $0x260] sm:$0xff]
    %v365 = vld [vmem:[%s1 + $0x270] sm:$0xff]
    %v366 = vld [vmem:[%s1 + $0x88] sm:$0xff]
    %v367 = vld [vmem:[%s1 + $0x98] sm:$0xff]
    %v368 = vld [vmem:[%s1 + $0xa8] sm:$0xff]
    %v369 = vld [vmem:[%s1 + $0xb8] sm:$0xff]
    %v370 = vld [vmem:[%s1 + $0xc8] sm:$0xff]
    %v371 = vld [vmem:[%s1 + $0xd8] sm:$0xff]
    %v372 = vld [vmem:[%s1 + $0xe8] sm:$0xff]
    %v373 = vld [vmem:[%s1 + $0xf8] sm:$0xff]
    %v374 = vld [vmem:[%s1 + $0x108] sm:$0xff]
    %v375 = vld [vmem:[%s1 + $0x118] sm:$0xff]
    %v376 = vld [vmem:[%s1 + $0x128] sm:$0xff]
    %v377 = vld [vmem:[%s1 + $0x138] sm:$0xff]
    %v378 = vld [vmem:[%s1 + $0x148] sm:$0xff]
    %v379 = vld [vmem:[%s1 + $0x158] sm:$0xff]
    %v380 = vld [vmem:[%s1 + $0x168] sm:$0xff]
    %v381 = vld [vmem:[%s1 + $0x178] sm:$0xff]
    %v382 = vld [vmem:[%s1 + $0x188] sm:$0xff]
    %v383 = vld [vmem:[%s1 + $0x198] sm:$0xff]
    %v384 = vld [vmem:[%s1 + $0x1a8] sm:$0xff]
    %v385 = vld [vmem:[%s1 + $0x1b8] sm:$0xff]
    %v386 = vld [vmem:[%s1 + $0x1c8] sm:$0xff]
    %v387 = vld [vmem:[%s1 + $0x1d8] sm:$0xff]
    %v388 = vld [vmem:[%s1 + $0x1e8] sm:$0xff]
    %v389 = vld [vmem:[%s1 + $0x1f8] sm:$0xff]
    %v390 = vld [vmem:[%s1 + $0x208] sm:$0xff]
    %v391 = vld [vmem:[%s1 + $0x218] sm:$0xff]
    %v392 = vld [vmem:[%s1 + $0x228] sm:$0xff]
    %v393 = vld [vmem:[%s1 + $0x238] sm:$0xff]
    %v394 = vld [vmem:[%s1 + $0x248] sm:$0xff]
    %v395 = vld [vmem:[%s1 + $0x258] sm:$0xff]
    %v396 = vld [vmem:[%s1 + $0x268] sm:$0xff]
    %v397 = vld [vmem:[%s1 + $0x278] sm:$0xff]
    %s398 = scalar_lea.vmem %s2, 32
    %v399 = vld [vmem:[%s398] ss:$8 sm:$0x3]
    %v401 = vunpack.c.l.b16 %v333
    %v402 = vunpack.c.h.b16 %v333
    %v403 = vpack.c.b16 %v401, %v401
    %v404 = vpack.c.b16 %v402, %v402
    %v439 = vunpack.c.l.b16 %v366
    %v440 = vunpack.c.h.b16 %v366
    %v441 = vunpack.c.l.b16 %v367
    %v442 = vunpack.c.h.b16 %v367
    %v443 = vunpack.c.l.b16 %v368
    %v444 = vunpack.c.h.b16 %v368
    %v445 = vunpack.c.l.b16 %v369
    %v446 = vunpack.c.h.b16 %v369
    %v447 = vunpack.c.l.b16 %v370
    %v448 = vunpack.c.h.b16 %v370
    %v449 = vunpack.c.l.b16 %v371
    %v450 = vunpack.c.h.b16 %v371
    %v451 = vunpack.c.l.b16 %v372
    %v452 = vunpack.c.h.b16 %v372
    %v453 = vunpack.c.l.b16 %v373
    %v454 = vunpack.c.h.b16 %v373
    %v455 = vunpack.c.l.b16 %v374
    %v456 = vunpack.c.h.b16 %v374
    %v457 = vunpack.c.l.b16 %v375
    %v458 = vunpack.c.h.b16 %v375
    %v459 = vunpack.c.l.b16 %v376
    %v460 = vunpack.c.h.b16 %v376
    %v461 = vunpack.c.l.b16 %v377
    %v462 = vunpack.c.h.b16 %v377
    %v463 = vunpack.c.l.b16 %v378
    %v464 = vunpack.c.h.b16 %v378
    %v465 = vunpack.c.l.b16 %v379
    %v466 = vunpack.c.h.b16 %v379
    %v467 = vunpack.c.l.b16 %v380
    %v468 = vunpack.c.h.b16 %v380
    %v469 = vunpack.c.l.b16 %v381
    %v470 = vunpack.c.h.b16 %v381
    %v471 = vunpack.c.l.b16 %v382
    %v472 = vunpack.c.h.b16 %v382
    %v473 = vunpack.c.l.b16 %v383
    %v474 = vunpack.c.h.b16 %v383
    %v475 = vunpack.c.l.b16 %v384
    %v476 = vunpack.c.h.b16 %v384
    %v477 = vunpack.c.l.b16 %v385
    %v478 = vunpack.c.h.b16 %v385
    %v479 = vunpack.c.l.b16 %v386
    %v480 = vunpack.c.h.b16 %v386
    %v481 = vunpack.c.l.b16 %v387
    %v482 = vunpack.c.h.b16 %v387
    %v483 = vunpack.c.l.b16 %v388
    %v484 = vunpack.c.h.b16 %v388
    %v485 = vunpack.c.l.b16 %v389
    %v486 = vunpack.c.h.b16 %v389
    %v487 = vunpack.c.l.b16 %v390
    %v488 = vunpack.c.h.b16 %v390
    %v489 = vunpack.c.l.b16 %v391
    %v490 = vunpack.c.h.b16 %v391
    %v491 = vunpack.c.l.b16 %v392
    %v492 = vunpack.c.h.b16 %v392
    %v493 = vunpack.c.l.b16 %v393
    %v494 = vunpack.c.h.b16 %v393
    %v495 = vunpack.c.l.b16 %v394
    %v496 = vunpack.c.h.b16 %v394
    %v497 = vunpack.c.l.b16 %v395
    %v498 = vunpack.c.h.b16 %v395
    %v499 = vunpack.c.l.b16 %v396
    %v500 = vunpack.c.h.b16 %v396
    %v501 = vunpack.c.l.b16 %v397
    %v502 = vunpack.c.h.b16 %v397
    %v503 = vpack.c.b16 %v441, %v439
    %v504 = vpack.c.b16 %v442, %v440
    %v505 = vpack.c.b16 %v445, %v443
    %v506 = vpack.c.b16 %v446, %v444
    %v507 = vpack.c.b16 %v449, %v447
    %v508 = vpack.c.b16 %v450, %v448
    %v509 = vpack.c.b16 %v453, %v451
    %v510 = vpack.c.b16 %v454, %v452
    %v511 = vpack.c.b16 %v457, %v455
    %v512 = vpack.c.b16 %v458, %v456
    %v513 = vpack.c.b16 %v461, %v459
    %v514 = vpack.c.b16 %v462, %v460
    %v515 = vpack.c.b16 %v465, %v463
    %v516 = vpack.c.b16 %v466, %v464
    %v517 = vpack.c.b16 %v469, %v467
    %v518 = vpack.c.b16 %v470, %v468
    %v519 = vpack.c.b16 %v473, %v471
    %v520 = vpack.c.b16 %v474, %v472
    %v521 = vpack.c.b16 %v477, %v475
    %v522 = vpack.c.b16 %v478, %v476
    %v523 = vpack.c.b16 %v481, %v479
    %v524 = vpack.c.b16 %v482, %v480
    %v525 = vpack.c.b16 %v485, %v483
    %v526 = vpack.c.b16 %v486, %v484
    %v527 = vpack.c.b16 %v489, %v487
    %v528 = vpack.c.b16 %v490, %v488
    %v529 = vpack.c.b16 %v493, %v491
    %v530 = vpack.c.b16 %v494, %v492
    %v531 = vpack.c.b16 %v497, %v495
    %v532 = vpack.c.b16 %v498, %v496
    %v533 = vpack.c.b16 %v501, %v499
    %v534 = vpack.c.b16 %v502, %v500
    %567 = vmatpush.bf16.msra.mxu0 %v517
    %568 = vmatpush.bf16.msra.mxu0 %v515
    %569 = vmatpush.bf16.msra.mxu0 %v513
    %570 = vmatpush.bf16.msra.mxu0 %v511
    %571 = vmatpush.bf16.msra.mxu0 %v509
    %572 = vmatpush.bf16.msra.mxu0 %v507
    %573 = vmatpush.bf16.msra.mxu0 %v505
    %574 = vmatpush.bf16.msra.mxu0 %v503
    %575 = vmatmul.bf16.gmra.mxu0 %v403
    %v576 = vpop.f32.mrf.mxu0
    %v577 = vadd.f32 0.0, %v576
    %v578 = vpop.f32.mrf.mxu0
    %579 = vdwg.mxu0
    %580 = vmatpush.bf16.msra.mxu0 %v533
    %581 = vmatpush.bf16.msra.mxu0 %v531
    %582 = vmatpush.bf16.msra.mxu0 %v529
    %583 = vmatpush.bf16.msra.mxu0 %v527
    %584 = vmatpush.bf16.msra.mxu0 %v525
    %585 = vmatpush.bf16.msra.mxu0 %v523
    %586 = vmatpush.bf16.msra.mxu0 %v521
    %587 = vmatpush.bf16.msra.mxu0 %v519
    %588 = vmatmul.bf16.gmra.mxu0 %v404
    %v589 = vpop.f32.mrf.mxu0
    %v590 = vadd.f32 %v577, %v589
    %v591 = vpop.f32.mrf.mxu0
    %592 = vdwg.mxu0
    %593 = vmatpush.bf16.msra.mxu0 %v518
    %594 = vmatpush.bf16.msra.mxu0 %v516
    %595 = vmatpush.bf16.msra.mxu0 %v514
    %596 = vmatpush.bf16.msra.mxu0 %v512
    %597 = vmatpush.bf16.msra.mxu0 %v510
    %598 = vmatpush.bf16.msra.mxu0 %v508
    %599 = vmatpush.bf16.msra.mxu0 %v506
    %600 = vmatpush.bf16.msra.mxu0 %v504
    %601 = vmatmul.bf16.gmra.mxu0 %v403
    %v602 = vpop.f32.mrf.mxu0
    %v603 = vadd.f32 0.0, %v602
    %v604 = vpop.f32.mrf.mxu0
    %605 = vdwg.mxu0
    %606 = vmatpush.bf16.msra.mxu0 %v534
    %607 = vmatpush.bf16.msra.mxu0 %v532
    %608 = vmatpush.bf16.msra.mxu0 %v530
    %609 = vmatpush.bf16.msra.mxu0 %v528
    %610 = vmatpush.bf16.msra.mxu0 %v526
    %611 = vmatpush.bf16.msra.mxu0 %v524
    %612 = vmatpush.bf16.msra.mxu0 %v522
    %613 = vmatpush.bf16.msra.mxu0 %v520
    %614 = vmatmul.bf16.gmra.mxu0 %v404
    %v615 = vpop.f32.mrf.mxu0
    %v616 = vadd.f32 %v603, %v615
    %v617 = vpop.f32.mrf.mxu0
    %618 = vdwg.mxu0
    %v620 = vunpack.c.l.b16 %v332
    %v621 = vunpack.c.h.b16 %v332
    %v622 = vpack.c.b16 %v620, %v620
    %v623 = vpack.c.b16 %v621, %v621
    %v658 = vunpack.c.l.b16 %v334
    %v659 = vunpack.c.h.b16 %v334
    %v660 = vunpack.c.l.b16 %v335
    %v661 = vunpack.c.h.b16 %v335
    %v662 = vunpack.c.l.b16 %v336
    %v663 = vunpack.c.h.b16 %v336
    %v664 = vunpack.c.l.b16 %v337
    %v665 = vunpack.c.h.b16 %v337
    %v666 = vunpack.c.l.b16 %v338
    %v667 = vunpack.c.h.b16 %v338
    %v668 = vunpack.c.l.b16 %v339
    %v669 = vunpack.c.h.b16 %v339
    %v670 = vunpack.c.l.b16 %v340
    %v671 = vunpack.c.h.b16 %v340
    %v672 = vunpack.c.l.b16 %v341
    %v673 = vunpack.c.h.b16 %v341
    %v674 = vunpack.c.l.b16 %v342
    %v675 = vunpack.c.h.b16 %v342
    %v676 = vunpack.c.l.b16 %v343
    %v677 = vunpack.c.h.b16 %v343
    %v678 = vunpack.c.l.b16 %v344
    %v679 = vunpack.c.h.b16 %v344
    %v680 = vunpack.c.l.b16 %v345
    %v681 = vunpack.c.h.b16 %v345
    %v682 = vunpack.c.l.b16 %v346
    %v683 = vunpack.c.h.b16 %v346
    %v684 = vunpack.c.l.b16 %v347
    %v685 = vunpack.c.h.b16 %v347
    %v686 = vunpack.c.l.b16 %v348
    %v687 = vunpack.c.h.b16 %v348
    %v688 = vunpack.c.l.b16 %v349
    %v689 = vunpack.c.h.b16 %v349
    %v690 = vunpack.c.l.b16 %v350
    %v691 = vunpack.c.h.b16 %v350
    %v692 = vunpack.c.l.b16 %v351
    %v693 = vunpack.c.h.b16 %v351
    %v694 = vunpack.c.l.b16 %v352
    %v695 = vunpack.c.h.b16 %v352
    %v696 = vunpack.c.l.b16 %v353
    %v697 = vunpack.c.h.b16 %v353
    %v698 = vunpack.c.l.b16 %v354
    %v699 = vunpack.c.h.b16 %v354
    %v700 = vunpack.c.l.b16 %v355
    %v701 = vunpack.c.h.b16 %v355
    %v702 = vunpack.c.l.b16 %v356
    %v703 = vunpack.c.h.b16 %v356
    %v704 = vunpack.c.l.b16 %v357
    %v705 = vunpack.c.h.b16 %v357
    %v706 = vunpack.c.l.b16 %v358
    %v707 = vunpack.c.h.b16 %v358
    %v708 = vunpack.c.l.b16 %v359
    %v709 = vunpack.c.h.b16 %v359
    %v710 = vunpack.c.l.b16 %v360
    %v711 = vunpack.c.h.b16 %v360
    %v712 = vunpack.c.l.b16 %v361
    %v713 = vunpack.c.h.b16 %v361
    %v714 = vunpack.c.l.b16 %v362
    %v715 = vunpack.c.h.b16 %v362
    %v716 = vunpack.c.l.b16 %v363
    %v717 = vunpack.c.h.b16 %v363
    %v718 = vunpack.c.l.b16 %v364
    %v719 = vunpack.c.h.b16 %v364
    %v720 = vunpack.c.l.b16 %v365
    %v721 = vunpack.c.h.b16 %v365
    %v722 = vpack.c.b16 %v660, %v658
    %v723 = vpack.c.b16 %v661, %v659
    %v724 = vpack.c.b16 %v664, %v662
    %v725 = vpack.c.b16 %v665, %v663
    %v726 = vpack.c.b16 %v668, %v666
    %v727 = vpack.c.b16 %v669, %v667
    %v728 = vpack.c.b16 %v672, %v670
    %v729 = vpack.c.b16 %v673, %v671
    %v730 = vpack.c.b16 %v676, %v674
    %v731 = vpack.c.b16 %v677, %v675
    %v732 = vpack.c.b16 %v680, %v678
    %v733 = vpack.c.b16 %v681, %v679
    %v734 = vpack.c.b16 %v684, %v682
    %v735 = vpack.c.b16 %v685, %v683
    %v736 = vpack.c.b16 %v688, %v686
    %v737 = vpack.c.b16 %v689, %v687
    %v738 = vpack.c.b16 %v692, %v690
    %v739 = vpack.c.b16 %v693, %v691
    %v740 = vpack.c.b16 %v696, %v694
    %v741 = vpack.c.b16 %v697, %v695
    %v742 = vpack.c.b16 %v700, %v698
    %v743 = vpack.c.b16 %v701, %v699
    %v744 = vpack.c.b16 %v704, %v702
    %v745 = vpack.c.b16 %v705, %v703
    %v746 = vpack.c.b16 %v708, %v706
    %v747 = vpack.c.b16 %v709, %v707
    %v748 = vpack.c.b16 %v712, %v710
    %v749 = vpack.c.b16 %v713, %v711
    %v750 = vpack.c.b16 %v716, %v714
    %v751 = vpack.c.b16 %v717, %v715
    %v752 = vpack.c.b16 %v720, %v718
    %v753 = vpack.c.b16 %v721, %v719
    %786 = vmatpush.bf16.msra.mxu0 %v736
    %787 = vmatpush.bf16.msra.mxu0 %v734
    %788 = vmatpush.bf16.msra.mxu0 %v732
    %789 = vmatpush.bf16.msra.mxu0 %v730
    %790 = vmatpush.bf16.msra.mxu0 %v728
    %791 = vmatpush.bf16.msra.mxu0 %v726
    %792 = vmatpush.bf16.msra.mxu0 %v724
    %793 = vmatpush.bf16.msra.mxu0 %v722
    %794 = vmatmul.bf16.gmra.mxu0 %v622
    %v795 = vpop.f32.mrf.mxu0
    %v796 = vadd.f32 %v590, %v795
    %v797 = vpop.f32.mrf.mxu0
    %798 = vdwg.mxu0
    %799 = vmatpush.bf16.msra.mxu0 %v752
    %800 = vmatpush.bf16.msra.mxu0 %v750
    %801 = vmatpush.bf16.msra.mxu0 %v748
    %802 = vmatpush.bf16.msra.mxu0 %v746
    %803 = vmatpush.bf16.msra.mxu0 %v744
    %804 = vmatpush.bf16.msra.mxu0 %v742
    %805 = vmatpush.bf16.msra.mxu0 %v740
    %806 = vmatpush.bf16.msra.mxu0 %v738
    %807 = vmatmul.bf16.gmra.mxu0 %v623
    %v808 = vpop.f32.mrf.mxu0
    %v809 = vadd.f32 %v796, %v808
    %v810 = vpop.f32.mrf.mxu0
    %811 = vdwg.mxu0
    %812 = vmatpush.bf16.msra.mxu0 %v737
    %813 = vmatpush.bf16.msra.mxu0 %v735
    %814 = vmatpush.bf16.msra.mxu0 %v733
    %815 = vmatpush.bf16.msra.mxu0 %v731
    %816 = vmatpush.bf16.msra.mxu0 %v729
    %817 = vmatpush.bf16.msra.mxu0 %v727
    %818 = vmatpush.bf16.msra.mxu0 %v725
    %819 = vmatpush.bf16.msra.mxu0 %v723
    %820 = vmatmul.bf16.gmra.mxu0 %v622
    %v821 = vpop.f32.mrf.mxu0
    %v822 = vadd.f32 %v616, %v821
    %v823 = vpop.f32.mrf.mxu0
    %824 = vdwg.mxu0
    %825 = vmatpush.bf16.msra.mxu0 %v753
    %826 = vmatpush.bf16.msra.mxu0 %v751
    %827 = vmatpush.bf16.msra.mxu0 %v749
    %828 = vmatpush.bf16.msra.mxu0 %v747
    %829 = vmatpush.bf16.msra.mxu0 %v745
    %830 = vmatpush.bf16.msra.mxu0 %v743
    %831 = vmatpush.bf16.msra.mxu0 %v741
    %832 = vmatpush.bf16.msra.mxu0 %v739
    %833 = vmatmul.bf16.gmra.mxu0 %v623
    %v834 = vpop.f32.mrf.mxu0
    %v835 = vadd.f32 %v822, %v834
    %v836 = vpop.f32.mrf.mxu0
    %837 = vdwg.mxu0
    %v839 = vperm.slane %v399, 0
    %v840 = vperm.slane %v399, 1
    %v843 = vadd.f32 %v809, %v839
    %v844 = vadd.f32 %v835, %v840
    %v845 = vmax.f32 %v843, 0.0
    %v846 = vmax.f32 %v844, 0.0
    %v847 = vpack.c.bf16 %v845, %v845
    %v848 = vpack.c.bf16 %v846, %v846
    %v849 = vld [vmem:[%s0 + $0x28] sm:$0xf]
    %v850 = vld [vmem:[%s0 + $0x2c] sm:$0xf]
    %v851 = vld [vmem:[%s0 + $0x30] sm:$0xf]
    %v852 = vld [vmem:[%s0 + $0x34] sm:$0xf]
    %v853 = vld [vmem:[%s0 + $0x38] sm:$0xf]
    %v854 = vld [vmem:[%s0 + $0x3c] sm:$0xf]
    %v855 = vld [vmem:[%s0 + $0x40] sm:$0xf]
    %v856 = vld [vmem:[%s0 + $0x44] sm:$0xf]
    %v857 = vld [vmem:[%s0 + $0x48] sm:$0xf]
    %v858 = vld [vmem:[%s0 + $0x4c] sm:$0xf]
    %v859 = vld [vmem:[%s0 + $0x50] sm:$0xf]
    %v860 = vld [vmem:[%s0 + $0x54] sm:$0xf]
    %v861 = vld [vmem:[%s0 + $0x58] sm:$0xf]
    %v862 = vld [vmem:[%s0 + $0x5c] sm:$0xf]
    %v863 = vld [vmem:[%s0 + $0x60] sm:$0xf]
    %v864 = vld [vmem:[%s0 + $0x64] sm:$0xf]
    %v865 = vld [vmem:[%s0 + $0x68] sm:$0xf]
    %v866 = vld [vmem:[%s0 + $0x6c] sm:$0xf]
    %v867 = vld [vmem:[%s0 + $0x70] sm:$0xf]
    %v868 = vld [vmem:[%s0 + $0x74] sm:$0xf]
    %v869 = vld [vmem:[%s0 + $0x78] sm:$0xf]
    %v870 = vld [vmem:[%s0 + $0x7c] sm:$0xf]
    %v871 = vld [vmem:[%s0 + $0x80] sm:$0xf]
    %v872 = vld [vmem:[%s0 + $0x84] sm:$0xf]
    %v873 = vld [vmem:[%s0 + $0x88] sm:$0xf]
    %v874 = vld [vmem:[%s0 + $0x8c] sm:$0xf]
    %v875 = vld [vmem:[%s0 + $0x90] sm:$0xf]
    %v876 = vld [vmem:[%s0 + $0x94] sm:$0xf]
    %v877 = vld [vmem:[%s0 + $0x98] sm:$0xf]
    %v878 = vld [vmem:[%s0 + $0x9c] sm:$0xf]
    %v879 = vld [vmem:[%s0 + $0xa0] sm:$0xf]
    %v880 = vld [vmem:[%s0 + $0xa4] sm:$0xf]
    %v881 = vld [vmem:[%s2 + $0x40] ss:$0 sm:$0xff]
    %v914 = vunpack.c.l.b16 %v849
    %v915 = vunpack.c.l.b16 %v850
    %v916 = vunpack.c.l.b16 %v851
    %v917 = vunpack.c.l.b16 %v852
    %v918 = vunpack.c.l.b16 %v853
    %v919 = vunpack.c.l.b16 %v854
    %v920 = vunpack.c.l.b16 %v855
    %v921 = vunpack.c.l.b16 %v856
    %v922 = vunpack.c.l.b16 %v857
    %v923 = vunpack.c.l.b16 %v858
    %v924 = vunpack.c.l.b16 %v859
    %v925 = vunpack.c.l.b16 %v860
    %v926 = vunpack.c.l.b16 %v861
    %v927 = vunpack.c.l.b16 %v862
    %v928 = vunpack.c.l.b16 %v863
    %v929 = vunpack.c.l.b16 %v864
    %v930 = vunpack.c.l.b16 %v865
    %v931 = vunpack.c.l.b16 %v866
    %v932 = vunpack.c.l.b16 %v867
    %v933 = vunpack.c.l.b16 %v868
    %v934 = vunpack.c.l.b16 %v869
    %v935 = vunpack.c.l.b16 %v870
    %v936 = vunpack.c.l.b16 %v871
    %v937 = vunpack.c.l.b16 %v872
    %v938 = vunpack.c.l.b16 %v873
    %v939 = vunpack.c.l.b16 %v874
    %v940 = vunpack.c.l.b16 %v875
    %v941 = vunpack.c.l.b16 %v876
    %v942 = vunpack.c.l.b16 %v877
    %v943 = vunpack.c.l.b16 %v878
    %v944 = vunpack.c.l.b16 %v879
    %v945 = vunpack.c.l.b16 %v880
    %v946 = vpack.c.b16 %v915, %v914
    %v947 = vpack.c.b16 %v917, %v916
    %v948 = vpack.c.b16 %v919, %v918
    %v949 = vpack.c.b16 %v921, %v920
    %v950 = vpack.c.b16 %v923, %v922
    %v951 = vpack.c.b16 %v925, %v924
    %v952 = vpack.c.b16 %v927, %v926
    %v953 = vpack.c.b16 %v929, %v928
    %v954 = vpack.c.b16 %v931, %v930
    %v955 = vpack.c.b16 %v933, %v932
    %v956 = vpack.c.b16 %v935, %v934
    %v957 = vpack.c.b16 %v937, %v936
    %v958 = vpack.c.b16 %v939, %v938
    %v959 = vpack.c.b16 %v941, %v940
    %v960 = vpack.c.b16 %v943, %v942
    %v961 = vpack.c.b16 %v945, %v944
    %978 = vmatpush.bf16.msra.mxu0 %v953
    %979 = vmatpush.bf16.msra.mxu0 %v952
    %980 = vmatpush.bf16.msra.mxu0 %v951
    %981 = vmatpush.bf16.msra.mxu0 %v950
    %982 = vmatpush.bf16.msra.mxu0 %v949
    %983 = vmatpush.bf16.msra.mxu0 %v948
    %984 = vmatpush.bf16.msra.mxu0 %v947
    %985 = vmatpush.bf16.msra.mxu0 %v946
    %986 = vmatmul.bf16.gmra.mxu0 %v847
    %v987 = vpop.f32.mrf.mxu0
    %v988 = vadd.f32 %v881, %v987
    %v989 = vpop.f32.mrf.mxu0
    %990 = vdwg.mxu0
    %991 = vmatpush.bf16.msra.mxu0 %v961
    %992 = vmatpush.bf16.msra.mxu0 %v960
    %993 = vmatpush.bf16.msra.mxu0 %v959
    %994 = vmatpush.bf16.msra.mxu0 %v958
    %995 = vmatpush.bf16.msra.mxu0 %v957
    %996 = vmatpush.bf16.msra.mxu0 %v956
    %997 = vmatpush.bf16.msra.mxu0 %v955
    %998 = vmatpush.bf16.msra.mxu0 %v954
    %999 = vmatmul.bf16.gmra.mxu0 %v848
    %v1000 = vpop.f32.mrf.mxu0
    %v1001 = vadd.f32 %v988, %v1000
    %v1002 = vpop.f32.mrf.mxu0
    %1003 = vdwg.mxu0
    %vm1004 = vcmask 9216
    %1005 = vst.msk [vmem:[#allocation2] sm:$0x3] %vm1004, %v1001
    // Predicated region
    $region14: #{gcn_context_forward.1} parent=1 // pred_check
      _
    $region15: #{gcn_context_forward.1} parent=1 // pred_check_branch
      %1007 = sbr.rel (0) target = $region17
    $region16: #{gcn_context_forward.1} parent=1 // pred_region
      %1009 = vsyncadd [#allocation3], 0
      %s1011 = sshll.u32 [#allocation2], 4
      %s1012 = int_to_ptr.vmem [resolvable:$true] %s1011
      %s1013 = sshll.u32 %s3, 4
      %s1014 = int_to_ptr.hbm [resolvable:$true] %s1013
      %1016 = dma.vmem_to_hbm [thread:$0]  %s1012, 32, %s1014, [#allocation3]
    $region17: #{gcn_context_forward.1} parent=1 // pred_fallthru
      _
    // Predicated region
    $region18: #{gcn_context_forward.1} parent=1 // pred_check
      _
    $region19: #{gcn_context_forward.1} parent=1 // pred_check_branch
      %1018 = sbr.rel (0) target = $region21
    $region20: #{gcn_context_forward.1} parent=1 // pred_region
      %1020 = dma.done [#allocation3], 32
    $region21: #{gcn_context_forward.1} parent=1 // pred_fallthru
      _
    %1021 = vsyncpa [#allocation3], 1

</llo_original>
